<compile_context>
chip_gen: v5e
topology: v5e:2x2
jax: 0.10.0
libtpu: 0.0.40
codegen_flags: <defaults>
</compile_context>

<pallas_src>
import functools

import jax
import jax.numpy as jnp
from jax import lax
from jax.experimental import pallas as pl
from jax.experimental.pallas import tpu as pltpu


def _round_up(x, m):
    return (x + m - 1) // m * m


# ---------------------------------------------------------------------------
# Pallas kernel: coset conv-as-matmul + fused per-channel statistics
# ---------------------------------------------------------------------------
def _coset_conv_kernel(w_ref, a_ref, y_ref, stats_ref):
    # w_ref     : (4*Cout, 4*Cin) bf16, resident across the grid (constant index_map)
    # a_ref     : (4*Cin, TM)     bf16 tile of the shifted-input matrix
    # y_ref     : (4*Cout, TM)    bf16 coset conv outputs (lane-dense minor dim = TM)
    # stats_ref : (1, 2, 4*Cout)  f32 per-tile [sum, sum_of_squares] partials
    acc = jnp.dot(w_ref[...], a_ref[...], preferred_element_type=jnp.float32)
    # bf16 store halves the largest HBM stream; statistics come from the f32 accumulator
    # so the data-dependent init does not drift.
    y_ref[...] = acc.astype(y_ref.dtype)
    sums = jnp.sum(acc, axis=1)[None, :]          # (1, 4*Cout)
    ssqs = jnp.sum(acc * acc, axis=1)[None, :]    # (1, 4*Cout)
    stats_ref[...] = jnp.concatenate([sums, ssqs], axis=0)[None, :, :]


def _coset_conv(w_mat, a_mat, *, tm, vmem_limit_bytes=None):
    c4out, c4in = w_mat.shape
    _, m_pad = a_mat.shape
    g = m_pad // tm
    cost = pl.CostEstimate(
        flops=2 * c4out * c4in * m_pad,
        transcendentals=0,
        bytes_accessed=(c4in + c4out) * m_pad * 2 + c4out * c4in * 2 + g * 2 * c4out * 4,
    )
    return pl.pallas_call(
        _coset_conv_kernel,
        out_shape=(
            jax.ShapeDtypeStruct((c4out, m_pad), jnp.bfloat16),
            jax.ShapeDtypeStruct((g, 2, c4out), jnp.float32),
        ),
        grid=(g,),
        in_specs=[
            pl.BlockSpec((c4out, c4in), lambda i: (0, 0)),   # weights stay resident
            pl.BlockSpec((c4in, tm), lambda i: (0, i)),
        ],
        out_specs=(
            pl.BlockSpec((c4out, tm), lambda i: (0, i)),
            pl.BlockSpec((1, 2, c4out), lambda i: (i, 0, 0)),
        ),
        compiler_params=pltpu.CompilerParams(
            dimension_semantics=("parallel",),
            vmem_limit_bytes=vmem_limit_bytes,
        ),
        cost_estimate=cost,
    )(w_mat, a_mat)


# ---------------------------------------------------------------------------
# Upsample forward (matches the PyTorch module's first forward pass)
# ---------------------------------------------------------------------------
@functools.partial(jax.jit, static_argnames=("tm", "vmem_limit_bytes"))
def upsample_forward(x_nchw, weight_v, *, tm=32768, vmem_limit_bytes=None):
    """x_nchw: (N, Cin, H, W), weight_v: (Cin, Cout, 3, 3) -> (N, Cout, 2H, 2W).

    `tm` is the spatial tile size (sweep 8192..65536 per generation; 32768 is a good
    default for v5e/v6e/v7x). Raise `vmem_limit_bytes` only if sweeping TM beyond ~64k.
    """
    N, Cin, H, W = x_nchw.shape
    _, Cout, KH, KW = weight_v.shape
    OH, OW = 2 * H, 2 * W

    # weight_norm(dim=1) with weight_g == 1: v / ||v|| over (in, kh, kw) per out-channel
    weight_v = weight_v.astype(jnp.float32)
    vnorm = jnp.sqrt(jnp.sum(weight_v * weight_v, axis=(0, 2, 3), keepdims=True))
    w_eff = weight_v / vnorm                                  # (Cin, Cout, 3, 3)

    # ---- sub-pixel (coset) weight matrix -------------------------------------
    # out[n,co,2p+a,2q+b] = sum_{dy,dx,ci} xpad[n,ci,p+dy,q+dx] * w[ci,co,kh(a,dy),kw(b,dx)]
    # with (parity, shift) -> kernel tap:  (0,0)->1, (1,0)->2, (1,1)->0, (0,1) invalid.
    kmap = {(0, 0): 1, (1, 0): 2, (1, 1): 0}
    w_big = jnp.zeros((2, 2, Cout, 2, 2, Cin), jnp.float32)   # (a, b, co, dy, dx, ci)
    for (a, dy), kh in kmap.items():
        for (b, dx), kw in kmap.items():
            w_big = w_big.at[a, b, :, dy, dx, :].set(w_eff[:, :, kh, kw].T)
    w_mat = w_big.reshape(4 * Cout, 4 * Cin).astype(jnp.bfloat16)

    # ---- shifted-input matrix A^T : (4*Cin, M) with M = N*H*W ----------------
    # bf16-first cast halves the HBM traffic of this construction pass.
    # TODO(synk): build the 4-shift panel in VMEM with a 1-row/1-col halo BlockSpec to
    # drop the HBM-materialized A entirely (worth ~15% more HBM traffic today).
    xpad = jnp.pad(x_nchw.astype(jnp.bfloat16), ((0, 0), (0, 0), (0, 1), (0, 1)))
    shifts = ((0, 0), (0, 1), (1, 0), (1, 1))
    xs = jnp.stack([xpad[:, :, dy:dy + H, dx:dx + W] for dy, dx in shifts], axis=0)
    a_mat = jnp.transpose(xs, (0, 2, 1, 3, 4)).reshape(4 * Cin, N * H * W)

    # ---- spatial tiling (pad with zero columns; statistics use the true count) ----
    M = N * H * W
    tm_eff = min(tm, _round_up(M, 256))
    if (M + tm_eff - 1) // tm_eff < 2 and M > 256:
        # keep >= 2 grid steps so the "parallel" axis can shard over v7x's 2 TensorCores
        tm_eff = _round_up((M + 1) // 2, 256)
    M_pad = _round_up(M, tm_eff)
    if M_pad != M:
        a_mat = jnp.pad(a_mat, ((0, 0), (0, M_pad - M)))      # zero cols -> zero outputs

    # ---- Pallas hot path: conv-as-matmul + fused per-channel stats -----------
    y, stats = _coset_conv(w_mat, a_mat, tm=tm_eff, vmem_limit_bytes=vmem_limit_bytes)

    # ---- finalize data-dependent init stats (f32, unbiased var like torch.var) ----
    # One-pass variance in f32, guarded with max(.,0); fine here since |mean| ~ std for
    # this init scheme (weight-normed random weights, zero-mean inputs).
    cnt = jnp.float32(N * OH * OW)
    sum_c = jnp.sum(stats[:, 0, :], axis=0).reshape(2, 2, Cout).sum(axis=(0, 1))  # (Cout,)
    ssq_c = jnp.sum(stats[:, 1, :], axis=0).reshape(2, 2, Cout).sum(axis=(0, 1))
    mean = sum_c / cnt
    var = jnp.maximum(ssq_c - cnt * mean * mean, 0.0) / (cnt - 1.0)
    scale = 0.01 / jnp.sqrt(var + 1e-8)

    # ---- normalization fused by XLA into the coset -> NCHW interleave --------
    # (ELU is Identity here; dropout with p=0.0 is the identity). Upcast to f32 BEFORE
    # applying (y - mean) * scale so the init statistics and output stay consistent.
    y = y[:, :M].astype(jnp.float32).reshape(2, 2, Cout, N, H, W)   # (a, b, co, n, p, q)
    out = (y - mean[None, None, :, None, None, None]) * scale[None, None, :, None, None, None]
    out = jnp.transpose(out, (3, 2, 4, 0, 5, 1)).reshape(N, Cout, OH, OW)
    return out


# ---------------------------------------------------------------------------
# Pure-XLA reference for validation (same math as the PyTorch module)
# ---------------------------------------------------------------------------
def _reference_forward(x, weight_v):
    N, Cin, H, W = x.shape
    _, Cout, _, _ = weight_v.shape
    vnorm = jnp.sqrt(jnp.sum(weight_v ** 2, axis=(0, 2, 3), keepdims=True))
    w_eff = weight_v / vnorm
    w_oihw = jnp.transpose(w_eff, (1, 0, 2, 3))[:, :, ::-1, ::-1]
    y = lax.conv_general_dilated(
        x, w_oihw, window_strides=(1, 1), padding=((1, 2), (1, 2)),
        lhs_dilation=(2, 2), dimension_numbers=("NCHW", "OIHW", "NCHW"),
        precision=lax.Precision.HIGHEST)
    t = jnp.transpose(y, (0, 2, 3, 1)).reshape(-1, Cout)
    m = jnp.mean(t, axis=0)
    v = jnp.var(t, axis=0, ddof=1)
    s = 0.01 / jnp.sqrt(v + 1e-8)
    return s[None, :, None, None] * (y - m[None, :, None, None])


# ---------------------------------------------------------------------------
if __name__ == "__main__":
    key = jax.random.PRNGKey(0)
    k_x, k_w = jax.random.split(key)

    N, Cin, Cout, H, W = 2, 4, 8, 16, 16
    x = jax.random.normal(k_x, (N, Cin, H, W), dtype=jnp.float32)
    # ConvTranspose2d weight_v shape: (in_channels, out_channels, kH, kW); init N(0, 0.05)
    weight_v = 0.05 * jax.random.normal(k_w, (Cin, Cout, 3, 3), dtype=jnp.float32)

    out = jax.block_until_ready(upsample_forward(x, weight_v))
    assert out.shape == (N, Cout, 2 * H, 2 * W), out.shape
    assert bool(jnp.all(jnp.isfinite(out)))

    ref = _reference_forward(x, weight_v)
    err = float(jnp.max(jnp.abs(out - ref)))
    assert err < 5e-3, f"max abs err vs reference = {err}"

    print("KERNEL_OK")
</pallas_src>

<mosaic_0001>
module attributes {stable_mosaic.version = 11 : i64} {
  func.func @_coset_conv_kernel(%arg0: i32, %arg1: memref<32x16xbf16, #tpu.memory_space<vmem>>, %arg2: memref<16x256xbf16, #tpu.memory_space<vmem>>, %arg3: memref<32x256xbf16, #tpu.memory_space<vmem>>, %arg4: memref<1x2x32xf32, #tpu.memory_space<vmem>>) attributes {dimension_semantics = [#tpu.dimension_semantics<parallel>], iteration_bounds = array<i64: 2>, scalar_prefetch = 0 : i64, scratch_operands = 0 : i64, tpu.core_type = #tpu.core_type<tc>, window_params = [{pipeline_mode = #tpu.pipeline_mode<synchronous>, transform_indices = @transform_0, window_bounds = array<i64: 32, 16>}, {transform_indices = @transform_1, window_bounds = array<i64: 16, 256>}, {transform_indices = @transform_2, window_bounds = array<i64: 32, 256>}, {transform_indices = @transform_3, window_bounds = array<i64: 1, 2, 32>}]} {
    %c0 = arith.constant 0 : index
    %c0_0 = arith.constant 0 : index
    %0 = vector.load %arg1[%c0, %c0_0] : memref<32x16xbf16, #tpu.memory_space<vmem>>, vector<32x16xbf16>
    %c0_1 = arith.constant 0 : index
    %c0_2 = arith.constant 0 : index
    %1 = vector.load %arg2[%c0_1, %c0_2] : memref<16x256xbf16, #tpu.memory_space<vmem>>, vector<16x256xbf16>
    %cst = arith.constant dense<0.000000e+00> : vector<32x256xf32>
    %2 = tpu.matmul %0, %1, %cst {dimension_numbers = #tpu.dot_dimension_numbers<[1], [0], [0], [1], [0, 0, 1, 1], [], []>} : vector<32x16xbf16>, vector<16x256xbf16>, vector<32x256xf32> -> vector<32x256xf32>
    %3 = arith.truncf %2 : vector<32x256xf32> to vector<32x256xbf16>
    %c0_3 = arith.constant 0 : index
    %c0_4 = arith.constant 0 : index
    %4 = vector.load %arg3[%c0_3, %c0_4] : memref<32x256xbf16, #tpu.memory_space<vmem>>, vector<32x256xbf16>
    tpu.vector_store %arg3[%c0_3, %c0_4], %3 {strides = array<i32>} : memref<32x256xbf16, #tpu.memory_space<vmem>>, vector<32x256xbf16>,
    %cst_5 = arith.constant dense<0.000000e+00> : vector<32xf32>
    %5 = vector.multi_reduction <add>, %2, %cst_5 [1] : vector<32x256xf32> to vector<32xf32>
    %6 = vector.shape_cast %5 : vector<32xf32> to vector<1x32xf32>
    %7 = arith.mulf %2, %2 : vector<32x256xf32>
    %cst_6 = arith.constant dense<0.000000e+00> : vector<32xf32>
    %8 = vector.multi_reduction <add>, %7, %cst_6 [1] : vector<32x256xf32> to vector<32xf32>
    %9 = vector.shape_cast %8 : vector<32xf32> to vector<1x32xf32>
    %10 = tpu.concatenate %6, %9 in 0 : vector<1x32xf32>, vector<1x32xf32> -> vector<2x32xf32>
    %11 = vector.shape_cast %10 : vector<2x32xf32> to vector<1x2x32xf32>
    %c0_7 = arith.constant 0 : index
    %c0_8 = arith.constant 0 : index
    %c0_9 = arith.constant 0 : index
    %12 = vector.load %arg4[%c0_7, %c0_8, %c0_9] : memref<1x2x32xf32, #tpu.memory_space<vmem>>, vector<1x2x32xf32>
    tpu.vector_store %arg4[%c0_7, %c0_8, %c0_9], %11 {strides = array<i32>} : memref<1x2x32xf32, #tpu.memory_space<vmem>>, vector<1x2x32xf32>,
    return
  }
  func.func @transform_0(%arg0: i32) -> (i32, i32) {
    %c0_i32 = arith.constant 0 : i32
    %c0_i32_0 = arith.constant 0 : i32
    %c0_i32_1 = arith.constant 0 : i32
    return %c0_i32, %c0_i32_0 : i32, i32
  }
  func.func @transform_1(%arg0: i32) -> (i32, i32) {
    %c0_i32 = arith.constant 0 : i32
    %c0_i32_0 = arith.constant 0 : i32
    return %c0_i32, %arg0 : i32, i32
  }
  func.func @transform_2(%arg0: i32) -> (i32, i32) {
    %c0_i32 = arith.constant 0 : i32
    %c0_i32_0 = arith.constant 0 : i32
    return %c0_i32, %arg0 : i32, i32
  }
  func.func @transform_3(%arg0: i32) -> (i32, i32, i32) {
    %c0_i32 = arith.constant 0 : i32
    %c0_i32_0 = arith.constant 0 : i32
    %c0_i32_1 = arith.constant 0 : i32
    return %arg0, %c0_i32, %c0_i32_0 : i32, i32, i32
  }
}

</mosaic_0001>

<llo_original>
// kernel: upsample_forward.1
$region0: #{upsample_forward.1}
  #allocation0 [shape = 'u32[]', space=smem, size = 0x4, offset = 0x4, fixed_abs, tag = 'smem constant byte address 0x4 - core index']
  #allocation1 [shape = 'u32[72,128]{1,0:T(1,128)}', space=vmem, size = 0x9000, scoped, tag = 'internal scratch']
  %s0 = inlined_call_operand.vmem [shape: bf16[32,16], index: 0, kind: input, shape index: {}]
  %s1 = inlined_call_operand.vmem [shape: bf16[16,512], index: 1, kind: input, shape index: {}]
  %s2 = inlined_call_operand.vmem [shape: bf16[32,512], index: 2, kind: output, shape index: {0}]
  %s3 = inlined_call_operand.vmem [shape: f32[2,2,32], index: 3, kind: output, shape index: {1}]
  %4 = xla_tuple %s2, %s3
  %s5 = sld [smem:[#allocation0]]
  $region121: #{upsample_forward.1} parent=0
    _
  %s7 = ssub.s32 1, %s5
  %s8 = scalar_select 0, %s7, %s5
  $region1: #{upsample_forward.1} parent=0
    #allocation2 [shape = 'u8[16384]{0}', space=vmem, size = 0x4000, scoped, tag = 'input window, operand 1']
    #allocation3 [shape = 'u8[32768]{0}', space=vmem, size = 0x8000, scoped, tag = 'output window, operand 0']
    loop: start=0, step=1, limit=4
    $region2: #{upsample_forward.1} parent=1 // loop_pre_header
      _
    $region3: #{upsample_forward.1} parent=1 // loop_header
      %s10 = sphi 0, %s14
      %p11 = scmp.ge.s32.totalorder %s10, 4
      %s18 = sphi 0, %s18
      %s20 = sphi 0, %s18
      %s21 = sphi 0, %s20
      %s35 = sphi 0, %s21
      %s41 = sphi 0, %s43
      %s44 = sphi 0, %s41
      %s45 = sphi 0, %s44
      %s61 = sphi 0, %s45
      %s67 = sphi 0, %s69
      %s70 = sphi 0, %s67
      %s71 = sphi 0, %s70
      %s87 = sphi 0, %s71
      %s93 = sphi 0, %s95
      %s96 = sphi 0, %s93
      %s97 = sphi 0, %s96
      %s113 = sphi 0, %s97
    $region4: #{upsample_forward.1} parent=1 // loop_header_branch
      %13 = sbr.rel (%p11) target = $region8
    $region5: #{upsample_forward.1} parent=1 // loop_body
      %s15 = ssub.s32 %s10, 1
      %s16 = ssub.s32 %s10, 2
      %s17 = sadd.s32 %s10, 1
      %s19 = sadd.s32 %s18, 1
      %p22 = scmp.eq.s32.totalorder %s10, 1
      %p23 = scmp.ne.s32.totalorder %s18, %s20
      %p24 = scmp.eq.s32.totalorder %s10, 0
      %p25 = por %p23, %p24
      %p26 = scmp.ne.s32.totalorder %s18, %s20
      %p27 = scmp.eq.s32.totalorder %s15, 1
      %p28 = por %p26, %p27
      %p29 = scmp.ne.s32.totalorder %s20, %s21
      %p30 = scmp.eq.s32.totalorder %s15, 0
      %p31 = por %p29, %p30
      %p32 = scmp.ne.s32.totalorder %s20, %s21
      %p33 = scmp.eq.s32.totalorder %s16, 1
      %p34 = por %p32, %p33
      %p36 = scmp.ne.s32.totalorder %s21, %s35
      %p37 = scmp.eq.s32.totalorder %s16, 0
      %p38 = por %p36, %p37
      %s39 = ssub.s32 %s10, %s17
      %p40 = scmp.eq.s32.totalorder %s39, 0
      %s42 = sadd.s32 %s41, 1
      %s43 = scalar_select %p40, %s41, %s42
      %p46 = pneg %p40
      %p47 = scmp.eq.s32.totalorder %s10, 1
      %p48 = por %p46, %p47
      %p49 = scmp.ne.s32.totalorder %s41, %s44
      %p50 = scmp.eq.s32.totalorder %s10, 0
      %p51 = por %p49, %p50
      %p52 = scmp.ne.s32.totalorder %s41, %s44
      %p53 = scmp.eq.s32.totalorder %s15, 1
      %p54 = por %p52, %p53
      %p55 = scmp.ne.s32.totalorder %s44, %s45
      %p56 = scmp.eq.s32.totalorder %s15, 0
      %p57 = por %p55, %p56
      %p58 = scmp.ne.s32.totalorder %s44, %s45
      %p59 = scmp.eq.s32.totalorder %s16, 1
      %p60 = por %p58, %p59
      %p62 = scmp.ne.s32.totalorder %s45, %s61
      %p63 = scmp.eq.s32.totalorder %s16, 0
      %p64 = por %p62, %p63
      %s65 = ssub.s32 %s10, %s17
      %p66 = scmp.eq.s32.totalorder %s65, 0
      %s68 = sadd.s32 %s67, 1
      %s69 = scalar_select %p66, %s67, %s68
      %p72 = pneg %p66
      %p73 = scmp.eq.s32.totalorder %s10, 1
      %p74 = por %p72, %p73
      %p75 = scmp.ne.s32.totalorder %s67, %s70
      %p76 = scmp.eq.s32.totalorder %s10, 0
      %p77 = por %p75, %p76
      %p78 = scmp.ne.s32.totalorder %s67, %s70
      %p79 = scmp.eq.s32.totalorder %s15, 1
      %p80 = por %p78, %p79
      %p81 = scmp.ne.s32.totalorder %s70, %s71
      %p82 = scmp.eq.s32.totalorder %s15, 0
      %p83 = por %p81, %p82
      %p84 = scmp.ne.s32.totalorder %s70, %s71
      %p85 = scmp.eq.s32.totalorder %s16, 1
      %p86 = por %p84, %p85
      %p88 = scmp.ne.s32.totalorder %s71, %s87
      %p89 = scmp.eq.s32.totalorder %s16, 0
      %p90 = por %p88, %p89
      %s91 = ssub.s32 %s10, %s17
      %p92 = scmp.eq.s32.totalorder %s91, 0
      %s94 = sadd.s32 %s93, 1
      %s95 = scalar_select %p92, %s93, %s94
      %p98 = pneg %p92
      %p99 = scmp.eq.s32.totalorder %s10, 1
      %p100 = por %p98, %p99
      %p101 = scmp.ne.s32.totalorder %s93, %s96
      %p102 = scmp.eq.s32.totalorder %s10, 0
      %p103 = por %p101, %p102
      %p104 = scmp.ne.s32.totalorder %s93, %s96
      %p105 = scmp.eq.s32.totalorder %s15, 1
      %p106 = por %p104, %p105
      %p107 = scmp.ne.s32.totalorder %s96, %s97
      %p108 = scmp.eq.s32.totalorder %s15, 0
      %p109 = por %p107, %p108
      %p110 = scmp.ne.s32.totalorder %s96, %s97
      %p111 = scmp.eq.s32.totalorder %s16, 1
      %p112 = por %p110, %p111
      %p114 = scmp.ne.s32.totalorder %s97, %s113
      %p115 = scmp.eq.s32.totalorder %s16, 0
      %p116 = por %p114, %p115
      %p117 = scmp.le.s32.totalorder 1, %s10
      %p118 = scmp.lt.s32.totalorder %s10, 3
      %p119 = pnand %p117, %p118
      %p120 = pneg %p119
      // Predicated region
      $region9: #{upsample_forward.1} parent=5 // pred_check
        _
      $region10: #{upsample_forward.1} parent=5 // pred_check_branch
        %122 = sbr.rel (%p119) target = $region12
      $region11: #{upsample_forward.1} parent=5 // pred_region
        %s123 = ssub.s32 %s10, 1
        // Predicated region
        $region13: #{upsample_forward.1} parent=11 // pred_check
          %p124 = pneg %p31
        $region14: #{upsample_forward.1} parent=11 // pred_check_branch
          %126 = sbr.rel (%p124) target = $region16
        $region15: #{upsample_forward.1} parent=11 // pred_region
          _
        $region16: #{upsample_forward.1} parent=11 // pred_fallthru
          _
      $region12: #{upsample_forward.1} parent=5 // pred_fallthru
        _
      %p127 = scmp.lt.s32.totalorder %s10, 2
      // Predicated region
      $region17: #{upsample_forward.1} parent=5 // pred_check
        %p128 = pneg %p127
      $region18: #{upsample_forward.1} parent=5 // pred_check_branch
        %130 = sbr.rel (%p128) target = $region20
      $region19: #{upsample_forward.1} parent=5 // pred_region
        // Predicated region
        $region21: #{upsample_forward.1} parent=19 // pred_check
          %p131 = pneg %p51
        $region22: #{upsample_forward.1} parent=19 // pred_check_branch
          %133 = sbr.rel (%p131) target = $region24
        $region23: #{upsample_forward.1} parent=19 // pred_region
          %s134 = sand.u32 %s41, 1
          %s135 = sand.u32 %s41, 1
          %s136 = smul.addr %s135, 16
          %s137 = scalar_lea.vmem [#allocation2], %s136
          %s138 = smul.u32 2, %s10
          %s139 = smul.addr %s138, 4
          %s140 = scalar_lea.vmem %s1, %s139
          // Predicated region
          $region25: #{upsample_forward.1} parent=23 // pred_check
            _
          $region26: #{upsample_forward.1} parent=23 // pred_check_branch
            %142 = sbr.rel (0) target = $region28
          $region27: #{upsample_forward.1} parent=23 // pred_region
            // Predicated region
            $region29: #{upsample_forward.1} parent=27 // pred_check
              _
            $region30: #{upsample_forward.1} parent=27 // pred_check_branch
              %144 = sbr.rel (0) target = $region32
            $region31: #{upsample_forward.1} parent=27 // pred_region
              // Predicated region
              $region44: #{upsample_forward.1} parent=31 // pred_check
                _
              $region45: #{upsample_forward.1} parent=31 // pred_check_branch
                %162 = sbr.rel (0) target = $region47
              $region46: #{upsample_forward.1} parent=31 // pred_region
                loop: start=0, step=1, limit=1
                $region48: #{upsample_forward.1} parent=46 // loop_pre_header
                  _
                $region49: #{upsample_forward.1} parent=46 // loop_header
                  %s164 = sphi 0, %s168
                  %p165 = scmp.ge.s32.totalorder %s164, 1
                  %s169 = sphi %s140, %s140
                  %s170 = sphi %s137, %s137
                $region50: #{upsample_forward.1} parent=46 // loop_header_branch
                  %167 = sbr.rel (%p165) target = $region54
                $region51: #{upsample_forward.1} parent=46 // loop_body
                  %v171 = vld [vmem:[%s169] sm:$0xff]
                  %172 = vst [vmem:[%s170] sm:$0xff] %v171
                  %v173 = vld [vmem:[%s169 + $0x10] sm:$0xff]
                  %174 = vst [vmem:[%s170 + $0x8] sm:$0xff] %v173
                $region52: #{upsample_forward.1} parent=46 // loop_footer
                  %s168 = sadd.s32 1, %s164
                $region53: #{upsample_forward.1} parent=46 // loop_footer_branch
                  %163 = sbr.rel target = $region49
                $region54: #{upsample_forward.1} parent=46 // loop_exit
                  _
              $region47: #{upsample_forward.1} parent=31 // pred_fallthru
                _
              // Predicated region
              $region55: #{upsample_forward.1} parent=31 // pred_check
                _
              $region56: #{upsample_forward.1} parent=31 // pred_check_branch
                %176 = sbr.rel target = $region58
              $region57: #{upsample_forward.1} parent=31 // pred_region
                _
              $region58: #{upsample_forward.1} parent=31 // pred_fallthru
                _
            $region32: #{upsample_forward.1} parent=27 // pred_fallthru
              _
            // Predicated region
            $region33: #{upsample_forward.1} parent=27 // pred_check
              _
            $region34: #{upsample_forward.1} parent=27 // pred_check_branch
              %146 = sbr.rel target = $region36
            $region35: #{upsample_forward.1} parent=27 // pred_region
              %s148 = ssub.s32 256, 1
              loop: start=0, step=1, limit=1
              $region37: #{upsample_forward.1} parent=35 // loop_pre_header
                _
              $region38: #{upsample_forward.1} parent=35 // loop_header
                %s150 = sphi 0, %s154
                %p151 = scmp.ge.s32.totalorder %s150, 1
                %s155 = sphi %s140, %s140
                %s156 = sphi %s137, %s137
              $region39: #{upsample_forward.1} parent=35 // loop_header_branch
                %153 = sbr.rel (%p151) target = $region43
              $region40: #{upsample_forward.1} parent=35 // loop_body
                %v157 = vld [vmem:[%s155] sm:%s148]
                %158 = vst [vmem:[%s156] sm:%s148] %v157
                %v159 = vld [vmem:[%s155 + $0x10] sm:%s148]
                %160 = vst [vmem:[%s156 + $0x8] sm:%s148] %v159
              $region41: #{upsample_forward.1} parent=35 // loop_footer
                %s154 = sadd.s32 1, %s150
              $region42: #{upsample_forward.1} parent=35 // loop_footer_branch
                %149 = sbr.rel target = $region38
              $region43: #{upsample_forward.1} parent=35 // loop_exit
                _
            $region36: #{upsample_forward.1} parent=27 // pred_fallthru
              _
          $region28: #{upsample_forward.1} parent=23 // pred_fallthru
            _
          %177 = vnop
        $region24: #{upsample_forward.1} parent=19 // pred_fallthru
          _
      $region20: #{upsample_forward.1} parent=5 // pred_fallthru
        _
      %p178 = scmp.le.s32.totalorder 1, %s10
      %p179 = scmp.lt.s32.totalorder %s10, 3
      %p180 = pnand %p178, %p179
      %p181 = pneg %p180
      // Predicated region
      $region59: #{upsample_forward.1} parent=5 // pred_check
        _
      $region60: #{upsample_forward.1} parent=5 // pred_check_branch
        %183 = sbr.rel (%p180) target = $region62
      $region61: #{upsample_forward.1} parent=5 // pred_region
        %s184 = ssub.s32 %s10, 1
        %s185 = sand.u32 %s44, 1
        %s186 = sand.u32 %s44, 1
        %s187 = smul.addr %s186, 16
        %s188 = scalar_lea.vmem [#allocation2], %s187
        // Predicated region
        $region63: #{upsample_forward.1} parent=61 // pred_check
          %p189 = pneg %p57
        $region64: #{upsample_forward.1} parent=61 // pred_check_branch
          %191 = sbr.rel (%p189) target = $region66
        $region65: #{upsample_forward.1} parent=61 // pred_region
          _
        $region66: #{upsample_forward.1} parent=61 // pred_fallthru
          _
        %p192 = pneg %p31
        %p193 = pneg %p28
        %s194 = sand.u32 %s44, 1
        %s195 = sand.u32 %s44, 1
        %s196 = smul.addr %s195, 16
        %s197 = scalar_lea.vmem [#allocation2], %s196
        %p198 = pneg %p57
        %p199 = pneg %p54
        %p200 = pneg %p83
        %p201 = pneg %p80
        %s202 = sand.u32 %s70, 1
        %s203 = sand.u32 %s70, 1
        %s204 = smul.addr %s203, 32
        %s205 = scalar_lea.vmem [#allocation3], %s204
        %p206 = pneg %p109
        %p207 = pneg %p106
        %p208 = scmp.lt.s32.totalorder %s15, 1
        %s209 = scalar_select %p208, %s15, 1
        %s210 = smul.addr %s209, 2
        %s211 = scalar_lea.vmem %s3, %s210
        %s212 = smul.u32 2, %s15
        %s213 = smul.u32 2, %s15
        %p214 = scmp.lt.s32.totalorder %s15, 1
        %s215 = scalar_select %p214, %s15, 1
        %s216 = smul.addr %s215, 2
        %s217 = scalar_lea.vmem %s3, %s216
        %v219 = vld [vmem:[%s0] sm:$0xf]
        %v220 = vld [vmem:[%s0 + $0x4] sm:$0xf]
        %v221 = vld [vmem:[%s0 + $0x8] sm:$0xf]
        %v222 = vld [vmem:[%s0 + $0xc] sm:$0xf]
        %v223 = vld [vmem:[%s188] sm:$0xff]
        %v224 = vld [vmem:[%s188 + $0x8] sm:$0xff]
        %v229 = vunpack.c.l.b16 %v219
        %v230 = vunpack.c.l.b16 %v220
        %v231 = vunpack.c.l.b16 %v221
        %v232 = vunpack.c.l.b16 %v222
        %v233 = vpack.c.b16 %v230, %v229
        %v234 = vpack.c.b16 %v232, %v231
        %v237 = vunpack.c.l.b16 %v223
        %v238 = vunpack.c.h.b16 %v223
        %v239 = vunpack.c.l.b16 %v224
        %v240 = vunpack.c.h.b16 %v224
        %v241 = vpack.c.b16 %v239, %v237
        %v242 = vpack.c.b16 %v240, %v238
        %vm245 = vcmask 130048
        %v247 = vsel %vm245, %v233, 0
        %v250 = vsel %vm245, %v234, 0
        %252 = vmatpush.bf16.msra.mxu0 0
        %253 = vmatpush.bf16.msra.mxu0 0
        %254 = vmatpush.bf16.msra.mxu0 0
        %255 = vmatpush.bf16.msra.mxu0 0
        %256 = vmatpush.bf16.msra.mxu0 0
        %257 = vmatpush.bf16.msra.mxu0 0
        %258 = vmatpush.bf16.msra.mxu0 0
        %259 = vmatpush.bf16.msra.mxu0 %v241
        %260 = vmatmul.bf16.gmra.mxu0 %v247
        %v261 = vpop.f32.mrf.mxu0
        %v262 = vadd.f32 0.0, %v261
        %v263 = vpop.f32.mrf.mxu0
        %v264 = vadd.f32 0.0, %v263
        %265 = vmatmul.bf16.gmra.mxu0 %v250
        %v266 = vpop.f32.mrf.mxu0
        %v267 = vadd.f32 0.0, %v266
        %v268 = vpop.f32.mrf.mxu0
        %v269 = vadd.f32 0.0, %v268
        %270 = vdwg.mxu0
        %271 = vmatpush.bf16.msra.mxu0 0
        %272 = vmatpush.bf16.msra.mxu0 0
        %273 = vmatpush.bf16.msra.mxu0 0
        %274 = vmatpush.bf16.msra.mxu0 0
        %275 = vmatpush.bf16.msra.mxu0 0
        %276 = vmatpush.bf16.msra.mxu0 0
        %277 = vmatpush.bf16.msra.mxu0 0
        %278 = vmatpush.bf16.msra.mxu0 %v242
        %279 = vmatmul.bf16.gmra.mxu0 %v247
        %v280 = vpop.f32.mrf.mxu0
        %v281 = vadd.f32 0.0, %v280
        %v282 = vpop.f32.mrf.mxu0
        %v283 = vadd.f32 0.0, %v282
        %284 = vmatmul.bf16.gmra.mxu0 %v250
        %v285 = vpop.f32.mrf.mxu0
        %v286 = vadd.f32 0.0, %v285
        %v287 = vpop.f32.mrf.mxu0
        %v288 = vadd.f32 0.0, %v287
        %289 = vdwg.mxu0
        %v290 = vpack.c.bf16 %v281, %v262
        %v291 = vpack.c.bf16 %v283, %v264
        %v292 = vpack.c.bf16 %v286, %v267
        %v293 = vpack.c.bf16 %v288, %v269
        %294 = vst [vmem:[%s205] sm:$0xff] %v290
        %295 = vst [vmem:[%s205 + $0x8] sm:$0xff] %v291
        %296 = vst [vmem:[%s205 + $0x10] sm:$0xff] %v292
        %297 = vst [vmem:[%s205 + $0x18] sm:$0xff] %v293
        %v298 = vadd.f32 %v262, %v281
        %299 = vadd.xlane.f32.xlu0 %v298
        %v300 = vpop.xlane.xlu0 %299
        %v301 = vadd.f32 %v264, %v283
        %302 = vadd.xlane.f32.xlu0 %v301
        %v303 = vpop.xlane.xlu0 %302
        %v304 = vadd.f32 %v267, %v286
        %305 = vadd.xlane.f32.xlu0 %v304
        %v306 = vpop.xlane.xlu0 %305
        %v307 = vadd.f32 %v269, %v288
        %308 = vadd.xlane.f32.xlu0 %v307
        %v309 = vpop.xlane.xlu0 %308
        %v310 = vmul.f32 %v262, %v262
        %v311 = vmul.f32 %v281, %v281
        %v312 = vmul.f32 %v264, %v264
        %v313 = vmul.f32 %v283, %v283
        %v314 = vmul.f32 %v267, %v267
        %v315 = vmul.f32 %v286, %v286
        %v316 = vmul.f32 %v269, %v269
        %v317 = vmul.f32 %v288, %v288
        %v318 = vadd.f32 %v310, %v311
        %319 = vadd.xlane.f32.xlu0 %v318
        %v320 = vpop.xlane.xlu0 %319
        %v321 = vadd.f32 %v312, %v313
        %322 = vadd.xlane.f32.xlu0 %v321
        %v323 = vpop.xlane.xlu0 %322
        %v324 = vadd.f32 %v314, %v315
        %325 = vadd.xlane.f32.xlu0 %v324
        %v326 = vpop.xlane.xlu0 %325
        %v327 = vadd.f32 %v316, %v317
        %328 = vadd.xlane.f32.xlu0 %v327
        %v329 = vpop.xlane.xlu0 %328
        %v334 = vlaneseq
        %v335 = vand.u32 %v334, 127
        %v336 = vperm.slane %v300, %v335
        %v337 = vadd.s32 %v335, 4294967288
        %v338 = vperm.slane %v303, %v337
        %vm339 = vcmask 130112
        %v340 = vsel %vm339, %v338, %v336
        %v341 = vadd.s32 %v335, 4294967280
        %v342 = vperm.slane %v306, %v341
        %vm343 = vcmask 195712
        %v344 = vsel %vm343, %v342, %v340
        %v345 = vadd.s32 %v335, 4294967272
        %v346 = vperm.slane %v309, %v345
        %vm347 = vcmask 261312
        %v348 = vsel %vm347, %v346, %v344
        %v354 = vperm.slane %v320, %v335
        %v355 = vperm.slane %v323, %v337
        %v356 = vsel %vm339, %v355, %v354
        %v357 = vperm.slane %v326, %v341
        %v358 = vsel %vm343, %v357, %v356
        %v359 = vperm.slane %v329, %v345
        %v360 = vsel %vm347, %v359, %v358
        %vm362 = vcmask 1040384
        %v363 = vsel %vm362, %v348, %v360
        %vm364 = vcmask 254976
        %365 = vst.msk [vmem:[%s217] sm:$0x3] %vm364, %v363
        %s366 = sand.u32 %s70, 1
        %s367 = sand.u32 %s70, 1
        %s368 = smul.addr %s367, 32
        %s369 = scalar_lea.vmem [#allocation3], %s368
        %p370 = scmp.lt.s32.totalorder %s15, 1
        %s371 = scalar_select %p370, %s15, 1
        %s372 = smul.addr %s371, 2
        %s373 = scalar_lea.vmem %s3, %s372
        // Predicated region
        $region67: #{upsample_forward.1} parent=61 // pred_check
          %p374 = pneg %p80
        $region68: #{upsample_forward.1} parent=61 // pred_check_branch
          %376 = sbr.rel (%p374) target = $region70
        $region69: #{upsample_forward.1} parent=61 // pred_region
          %s377 = smul.u32 2, %s15
          %s378 = smul.addr %s377, 4
          %s379 = scalar_lea.vmem %s2, %s378
          // Predicated region
          $region71: #{upsample_forward.1} parent=69 // pred_check
            _
          $region72: #{upsample_forward.1} parent=69 // pred_check_branch
            %381 = sbr.rel (0) target = $region74
          $region73: #{upsample_forward.1} parent=69 // pred_region
            // Predicated region
            $region75: #{upsample_forward.1} parent=73 // pred_check
              _
            $region76: #{upsample_forward.1} parent=73 // pred_check_branch
              %383 = sbr.rel (0) target = $region78
            $region77: #{upsample_forward.1} parent=73 // pred_region
              // Predicated region
              $region90: #{upsample_forward.1} parent=77 // pred_check
                _
              $region91: #{upsample_forward.1} parent=77 // pred_check_branch
                %405 = sbr.rel (0) target = $region93
              $region92: #{upsample_forward.1} parent=77 // pred_region
                loop: start=0, step=1, limit=1
                $region94: #{upsample_forward.1} parent=92 // loop_pre_header
                  _
                $region95: #{upsample_forward.1} parent=92 // loop_header
                  %s407 = sphi 0, %s411
                  %p408 = scmp.ge.s32.totalorder %s407, 1
                  %s412 = sphi %s369, %s369
                  %s413 = sphi %s379, %s379
                $region96: #{upsample_forward.1} parent=92 // loop_header_branch
                  %410 = sbr.rel (%p408) target = $region100
                $region97: #{upsample_forward.1} parent=92 // loop_body
                  %v414 = vld [vmem:[%s412] sm:$0xff]
                  %415 = vst [vmem:[%s413] sm:$0xff] %v414
                  %v416 = vld [vmem:[%s412 + $0x8] sm:$0xff]
                  %417 = vst [vmem:[%s413 + $0x10] sm:$0xff] %v416
                  %v418 = vld [vmem:[%s412 + $0x10] sm:$0xff]
                  %419 = vst [vmem:[%s413 + $0x20] sm:$0xff] %v418
                  %v420 = vld [vmem:[%s412 + $0x18] sm:$0xff]
                  %421 = vst [vmem:[%s413 + $0x30] sm:$0xff] %v420
                $region98: #{upsample_forward.1} parent=92 // loop_footer
                  %s411 = sadd.s32 1, %s407
                $region99: #{upsample_forward.1} parent=92 // loop_footer_branch
                  %406 = sbr.rel target = $region95
                $region100: #{upsample_forward.1} parent=92 // loop_exit
                  _
              $region93: #{upsample_forward.1} parent=77 // pred_fallthru
                _
              // Predicated region
              $region101: #{upsample_forward.1} parent=77 // pred_check
                _
              $region102: #{upsample_forward.1} parent=77 // pred_check_branch
                %423 = sbr.rel target = $region104
              $region103: #{upsample_forward.1} parent=77 // pred_region
                _
              $region104: #{upsample_forward.1} parent=77 // pred_fallthru
                _
            $region78: #{upsample_forward.1} parent=73 // pred_fallthru
              _
            // Predicated region
            $region79: #{upsample_forward.1} parent=73 // pred_check
              _
            $region80: #{upsample_forward.1} parent=73 // pred_check_branch
              %385 = sbr.rel target = $region82
            $region81: #{upsample_forward.1} parent=73 // pred_region
              %s387 = ssub.s32 256, 1
              loop: start=0, step=1, limit=1
              $region83: #{upsample_forward.1} parent=81 // loop_pre_header
                _
              $region84: #{upsample_forward.1} parent=81 // loop_header
                %s389 = sphi 0, %s393
                %p390 = scmp.ge.s32.totalorder %s389, 1
                %s394 = sphi %s369, %s369
                %s395 = sphi %s379, %s379
              $region85: #{upsample_forward.1} parent=81 // loop_header_branch
                %392 = sbr.rel (%p390) target = $region89
              $region86: #{upsample_forward.1} parent=81 // loop_body
                %v396 = vld [vmem:[%s394] sm:%s387]
                %397 = vst [vmem:[%s395] sm:%s387] %v396
                %v398 = vld [vmem:[%s394 + $0x8] sm:%s387]
                %399 = vst [vmem:[%s395 + $0x10] sm:%s387] %v398
                %v400 = vld [vmem:[%s394 + $0x10] sm:%s387]
                %401 = vst [vmem:[%s395 + $0x20] sm:%s387] %v400
                %v402 = vld [vmem:[%s394 + $0x18] sm:%s387]
                %403 = vst [vmem:[%s395 + $0x30] sm:%s387] %v402
              $region87: #{upsample_forward.1} parent=81 // loop_footer
                %s393 = sadd.s32 1, %s389
              $region88: #{upsample_forward.1} parent=81 // loop_footer_branch
                %388 = sbr.rel target = $region84
              $region89: #{upsample_forward.1} parent=81 // loop_exit
                _
            $region82: #{upsample_forward.1} parent=73 // pred_fallthru
              _
          $region74: #{upsample_forward.1} parent=69 // pred_fallthru
            _
          %424 = vnop
        $region70: #{upsample_forward.1} parent=61 // pred_fallthru
          _
        // Predicated region
        $region105: #{upsample_forward.1} parent=61 // pred_check
          %p425 = pneg %p106
        $region106: #{upsample_forward.1} parent=61 // pred_check_branch
          %427 = sbr.rel (%p425) target = $region108
        $region107: #{upsample_forward.1} parent=61 // pred_region
          _
        $region108: #{upsample_forward.1} parent=61 // pred_fallthru
          _
      $region62: #{upsample_forward.1} parent=5 // pred_fallthru
        _
      %p428 = scmp.le.s32.totalorder 2, %s10
      // Predicated region
      $region109: #{upsample_forward.1} parent=5 // pred_check
        %p429 = pneg %p428
      $region110: #{upsample_forward.1} parent=5 // pred_check_branch
        %431 = sbr.rel (%p429) target = $region112
      $region111: #{upsample_forward.1} parent=5 // pred_region
        %s432 = ssub.s32 %s10, 2
        // Predicated region
        $region113: #{upsample_forward.1} parent=111 // pred_check
          %p433 = pneg %p86
        $region114: #{upsample_forward.1} parent=111 // pred_check_branch
          %435 = sbr.rel (%p433) target = $region116
        $region115: #{upsample_forward.1} parent=111 // pred_region
          %s436 = sand.u32 %s71, 1
          %s437 = sand.u32 %s71, 1
          %s438 = smul.addr %s437, 32
          %s439 = scalar_lea.vmem [#allocation3], %s438
        $region116: #{upsample_forward.1} parent=111 // pred_fallthru
          _
        // Predicated region
        $region117: #{upsample_forward.1} parent=111 // pred_check
          %p440 = pneg %p112
        $region118: #{upsample_forward.1} parent=111 // pred_check_branch
          %442 = sbr.rel (%p440) target = $region120
        $region119: #{upsample_forward.1} parent=111 // pred_region
          %p443 = scmp.lt.s32.totalorder %s16, 1
          %s444 = scalar_select %p443, %s16, 1
          %s445 = smul.addr %s444, 2
          %s446 = scalar_lea.vmem %s3, %s445
        $region120: #{upsample_forward.1} parent=111 // pred_fallthru
          _
      $region112: #{upsample_forward.1} parent=5 // pred_fallthru
        _
    $region6: #{upsample_forward.1} parent=1 // loop_footer
      %s14 = sadd.s32 1, %s10
    $region7: #{upsample_forward.1} parent=1 // loop_footer_branch
      %9 = sbr.rel target = $region3
    $region8: #{upsample_forward.1} parent=1 // loop_exit
      _

</llo_original>
